<compile_context>
chip_gen: v5e
topology: v5e:2x2
jax: 0.10.0
libtpu: 0.0.40
codegen_flags: <defaults>
</compile_context>

<pallas_src>
import jax
import jax.numpy as jnp
from jax.experimental import pallas as pl
from jax.experimental.pallas import tpu as pltpu

# Module hyper-parameters (WeightNet.__init__ defaults)
N_PIC = 5        # n_pic
HIDDEN = 256     # warper hidden width (fixed at 256 in the module)
W_DIM = 32       # w_dim

SUBLANE = 8
K_PAD = 8        # n_pic padded to the f32 sublane minimum -> layer 1 on the MXU


def _round_up(x, m):
    return ((x + m - 1) // m) * m


def warper_kernel(core_ref, w1_ref, b1_ref, w2_ref, b2_ref, out_ref):
    """Fused warper tile: (tb,8)@(8,256) -> +b1 -> tanh -> (tb,256)@(256,32) -> +b2."""
    # Layer 1 on the MXU (K=8 zero-padded; zero w1 rows contribute nothing).
    h = jnp.tanh(
        jnp.dot(core_ref[...], w1_ref[...], preferred_element_type=jnp.float32)
        + b1_ref[...]
    )
    # Layer 2 on the MXU; output stays at w_dim lanes (less HBM writeback).
    y = jnp.dot(h, w2_ref[...], preferred_element_type=jnp.float32) + b2_ref[...]
    out_ref[...] = y.astype(out_ref.dtype)


def prepare_warper_params(w1, b1, w2, b2):
    """One-time weight prep, hoisted out of the per-call hot path.

    w1: (n_pic, 256), b1: (256,), w2: (256, w_dim), b2: (w_dim,)
    """
    n_pic, hidden = w1.shape
    w1p = jnp.pad(w1, ((0, K_PAD - n_pic), (0, 0)))   # (8, 256), zero rows
    b1r = b1.reshape(1, hidden)                       # (1, 256)
    b2r = b2.reshape(1, -1)                           # (1, w_dim)
    return (w1p, b1r, w2, b2r)


def warper_forward(core, params, *, single_tile_rows=512):
    """Batched warper MLP.  core: (B, n_pic) f32 -> (B, w_dim) f32."""
    w1p, b1r, w2, b2r = params
    B, n_pic = core.shape
    k_pad, hidden = w1p.shape
    w_dim = w2.shape[1]

    # --- batch tiling ---------------------------------------------------------
    b_min = _round_up(max(B, SUBLANE), SUBLANE)
    if b_min <= single_tile_rows:
        # Single ungridded call: everything VMEM-resident once, no grid steps.
        n_tiles, tb = 1, b_min
    else:
        # Even tile count so the "parallel" batch axis shards across both
        # TensorCores on v7x; tiles are minimally padded (round_up(B/n, 8)).
        n_tiles = pl.cdiv(b_min, single_tile_rows)
        n_tiles += n_tiles % 2
        tb = _round_up(pl.cdiv(B, n_tiles), SUBLANE)
    b_pad = n_tiles * tb

    # Pad batch rows (sliced off below) and K columns (zeros x zero w1 rows).
    core_p = jnp.pad(core, ((0, b_pad - B), (0, k_pad - n_pic)))

    cost = pl.CostEstimate(
        flops=2 * b_pad * (k_pad * hidden + hidden * w_dim),
        transcendentals=b_pad * hidden,
        bytes_accessed=4 * (core_p.size + w1p.size + b1r.size + w2.size
                            + b2r.size + b_pad * w_dim),
    )

    # VMEM budget from the chosen tile: in/out tiles (double-buffered on the
    # grid path), the (tb, hidden) intermediates, the weights, plus headroom.
    per_tile_bytes = 4 * (tb * k_pad + tb * w_dim + 3 * tb * hidden)
    weight_bytes = 4 * (w1p.size + b1r.size + w2.size + b2r.size)
    vmem_limit = int(min(32 << 20,
                         max(8 << 20, 2 * per_tile_bytes + 2 * weight_bytes + (4 << 20))))

    out_shape = jax.ShapeDtypeStruct((b_pad, w_dim), core.dtype)

    if n_tiles == 1:
        vmem_spec = pl.BlockSpec(memory_space=pltpu.MemorySpace.VMEM)
        out = pl.pallas_call(
            warper_kernel,
            out_shape=out_shape,
            in_specs=[vmem_spec, vmem_spec, vmem_spec, vmem_spec, vmem_spec],
            out_specs=vmem_spec,
            cost_estimate=cost,
            compiler_params=pltpu.CompilerParams(vmem_limit_bytes=vmem_limit),
        )(core_p, w1p, b1r, w2, b2r)
    else:
        out = pl.pallas_call(
            warper_kernel,
            out_shape=out_shape,
            grid=(n_tiles,),
            in_specs=[
                pl.BlockSpec((tb, k_pad), lambda i: (i, 0)),
                pl.BlockSpec((k_pad, hidden), lambda i: (0, 0)),
                pl.BlockSpec((1, hidden), lambda i: (0, 0)),
                pl.BlockSpec((hidden, w_dim), lambda i: (0, 0)),
                pl.BlockSpec((1, w_dim), lambda i: (0, 0)),
            ],
            out_specs=pl.BlockSpec((tb, w_dim), lambda i: (i, 0)),
            cost_estimate=cost,
            compiler_params=pltpu.CompilerParams(
                dimension_semantics=("parallel",),
                vmem_limit_bytes=vmem_limit,
            ),
        )(core_p, w1p, b1r, w2, b2r)

    return out[:B, :]


def weightnet_forward(core_ast, params):
    """WeightNet.forward: core = stack(core_ast).view(1, -1); return warper(core).

    Note: at B=1 the call is dominated by fixed launch + weight-DMA overhead;
    callers with many query points should batch them through warper_forward.
    """
    core = core_ast.reshape(1, -1)             # (1, n_pic)
    return warper_forward(core, params)


if __name__ == "__main__":
    key = jax.random.PRNGKey(0)
    k_core, k_w1, k_b1, k_w2, k_b2, k_b300, k_b1200 = jax.random.split(key, 7)

    # warper parameters (deterministic init; stored (in, out) — see header).
    w1 = jax.random.normal(k_w1, (N_PIC, HIDDEN), jnp.float32) / jnp.sqrt(N_PIC)
    b1 = jax.random.normal(k_b1, (HIDDEN,), jnp.float32) * 0.01
    w2 = jax.random.normal(k_w2, (HIDDEN, W_DIM), jnp.float32) / jnp.sqrt(HIDDEN)
    b2 = jax.random.normal(k_b2, (W_DIM,), jnp.float32) * 0.01

    params = prepare_warper_params(w1, b1, w2, b2)   # init-time prep (hoisted)

    def ref_warper(c):
        return jnp.tanh(c @ w1 + b1.reshape(1, -1)) @ w2 + b2.reshape(1, -1)

    # --- forward() semantics: B = 1 ------------------------------------------
    # TODO(synk): PIC.predict (per-cluster predictive interpolation, built on a
    # sklearn KMeans partition) is not provided; its n_pic scalar outputs are
    # synthesized deterministically and fed as `core_ast`.
    core_ast = jax.random.normal(k_core, (N_PIC,), jnp.float32)
    out1 = jax.block_until_ready(weightnet_forward(core_ast, params))
    ref1 = ref_warper(core_ast.reshape(1, -1))
    assert out1.shape == (1, W_DIM), out1.shape
    assert out1.dtype == jnp.float32
    assert jnp.allclose(out1, ref1, atol=1e-5, rtol=1e-5), float(
        jnp.max(jnp.abs(out1 - ref1)))

    # --- batched warper (sample()-style shape), single-tile path: B=300 pads
    # only to 304 rows, one ungridded call -------------------------------------
    B = 300
    core_b = jax.random.normal(k_b300, (B, N_PIC), jnp.float32)
    out_b = jax.block_until_ready(warper_forward(core_b, params))
    ref_b = ref_warper(core_b)
    assert out_b.shape == (B, W_DIM), out_b.shape
    assert jnp.allclose(out_b, ref_b, atol=1e-4, rtol=1e-4), float(
        jnp.max(jnp.abs(out_b - ref_b)))

    # --- large batch: exercises the even "parallel" grid path ----------------
    B2 = 1200
    core_big = jax.random.normal(k_b1200, (B2, N_PIC), jnp.float32)
    out_big = jax.block_until_ready(warper_forward(core_big, params))
    ref_big = ref_warper(core_big)
    assert out_big.shape == (B2, W_DIM), out_big.shape
    assert jnp.allclose(out_big, ref_big, atol=1e-4, rtol=1e-4), float(
        jnp.max(jnp.abs(out_big - ref_big)))

    print("KERNEL_OK")
</pallas_src>

<mosaic_0001>
module attributes {stable_mosaic.version = 11 : i64} {
  func.func @warper_kernel(%arg0: memref<8x8xf32, #tpu.memory_space<vmem>>, %arg1: memref<8x256xf32, #tpu.memory_space<vmem>>, %arg2: memref<1x256xf32, #tpu.memory_space<vmem>>, %arg3: memref<256x32xf32, #tpu.memory_space<vmem>>, %arg4: memref<1x32xf32, #tpu.memory_space<vmem>>, %arg5: memref<8x32xf32, #tpu.memory_space<vmem>>) attributes {dimension_semantics = [], scalar_prefetch = 0 : i64, scratch_operands = 0 : i64, tpu.core_type = #tpu.core_type<tc>} {
    %c0 = arith.constant 0 : index
    %c0_0 = arith.constant 0 : index
    %0 = vector.load %arg0[%c0, %c0_0] : memref<8x8xf32, #tpu.memory_space<vmem>>, vector<8x8xf32>
    %c0_1 = arith.constant 0 : index
    %c0_2 = arith.constant 0 : index
    %1 = vector.load %arg1[%c0_1, %c0_2] : memref<8x256xf32, #tpu.memory_space<vmem>>, vector<8x256xf32>
    %cst = arith.constant dense<0.000000e+00> : vector<8x256xf32>
    %2 = tpu.matmul %0, %1, %cst {dimension_numbers = #tpu.dot_dimension_numbers<[1], [0], [0], [1], [0, 0, 1, 1], [], []>} : vector<8x8xf32>, vector<8x256xf32>, vector<8x256xf32> -> vector<8x256xf32>
    %c0_3 = arith.constant 0 : index
    %c0_4 = arith.constant 0 : index
    %3 = vector.load %arg2[%c0_3, %c0_4] : memref<1x256xf32, #tpu.memory_space<vmem>>, vector<1x256xf32>
    %4 = vector.broadcast %3 : vector<1x256xf32> to vector<8x256xf32>
    %5 = arith.addf %2, %4 : vector<8x256xf32>
    %6 = math.tanh %5 : vector<8x256xf32>
    %c0_5 = arith.constant 0 : index
    %c0_6 = arith.constant 0 : index
    %7 = vector.load %arg3[%c0_5, %c0_6] : memref<256x32xf32, #tpu.memory_space<vmem>>, vector<256x32xf32>
    %cst_7 = arith.constant dense<0.000000e+00> : vector<8x32xf32>
    %8 = tpu.matmul %6, %7, %cst_7 {dimension_numbers = #tpu.dot_dimension_numbers<[1], [0], [0], [1], [0, 0, 1, 1], [], []>} : vector<8x256xf32>, vector<256x32xf32>, vector<8x32xf32> -> vector<8x32xf32>
    %c0_8 = arith.constant 0 : index
    %c0_9 = arith.constant 0 : index
    %9 = vector.load %arg4[%c0_8, %c0_9] : memref<1x32xf32, #tpu.memory_space<vmem>>, vector<1x32xf32>
    %10 = vector.broadcast %9 : vector<1x32xf32> to vector<8x32xf32>
    %11 = arith.addf %8, %10 : vector<8x32xf32>
    %c0_10 = arith.constant 0 : index
    %c0_11 = arith.constant 0 : index
    %12 = vector.load %arg5[%c0_10, %c0_11] : memref<8x32xf32, #tpu.memory_space<vmem>>, vector<8x32xf32>
    tpu.vector_store %arg5[%c0_10, %c0_11], %11 {strides = array<i32>} : memref<8x32xf32, #tpu.memory_space<vmem>>, vector<8x32xf32>,
    return
  }
}

</mosaic_0001>

<llo_original>
// kernel: tpu_custom_call.1
$region0: #{tpu_custom_call.1}
  #allocation0 [shape = 'u32[]', space=smem, size = 0x4, offset = 0x4, fixed_abs, tag = 'smem constant byte address 0x4 - core index']
  #allocation1 [shape = 'u32[72,128]{1,0:T(1,128)}', space=vmem, size = 0x9000, scoped, tag = 'internal scratch']
  %s0 = inlined_call_operand.vmem [shape: f32[8,8], index: 0, kind: input, shape index: {}]
  %s1 = inlined_call_operand.vmem [shape: f32[8,256], index: 1, kind: input, shape index: {}]
  %s2 = inlined_call_operand.vmem [shape: f32[1,256], index: 2, kind: input, shape index: {}]
  %s3 = inlined_call_operand.vmem [shape: f32[256,32], index: 3, kind: input, shape index: {}]
  %s4 = inlined_call_operand.vmem [shape: f32[1,32], index: 4, kind: input, shape index: {}]
  %s5 = inlined_call_operand.hbm [shape: f32[8,32], index: 5, kind: output, shape index: {}]
  %s6 = sld [smem:[#allocation0]]
  $region30: #{tpu_custom_call.1} parent=0
    _
  %s8 = ssub.s32 1, %s6
  %s9 = scalar_select 0, %s8, %s6
  $region1: #{tpu_custom_call.1} parent=0
    #allocation2 [shape = 'u8[4096]{0}', space=vmem, size = 0x1000, scoped, tag = 'output window, operand 0, single buffered']
    #allocation3 [shape = 's32[1]{0}', space=sflag, size = 0x4, scoped, tag = 'scoped memory for tpu_custom_call.1']
    %10 = vsyncpa [#allocation3], 0
    // Predicated region
    $region2: #{tpu_custom_call.1} parent=1 // pred_check
      _
    $region3: #{tpu_custom_call.1} parent=1 // pred_check_branch
      %12 = sbr.rel (0) target = $region5
    $region4: #{tpu_custom_call.1} parent=1 // pred_region
      _
    $region5: #{tpu_custom_call.1} parent=1 // pred_fallthru
      _
    // Predicated region
    $region6: #{tpu_custom_call.1} parent=1 // pred_check
      _
    $region7: #{tpu_custom_call.1} parent=1 // pred_check_branch
      %14 = sbr.rel (0) target = $region9
    $region8: #{tpu_custom_call.1} parent=1 // pred_region
      _
    $region9: #{tpu_custom_call.1} parent=1 // pred_fallthru
      _
    // Predicated region
    $region10: #{tpu_custom_call.1} parent=1 // pred_check
      _
    $region11: #{tpu_custom_call.1} parent=1 // pred_check_branch
      %16 = sbr.rel (0) target = $region13
    $region12: #{tpu_custom_call.1} parent=1 // pred_region
      _
    $region13: #{tpu_custom_call.1} parent=1 // pred_fallthru
      _
    // Predicated region
    $region14: #{tpu_custom_call.1} parent=1 // pred_check
      _
    $region15: #{tpu_custom_call.1} parent=1 // pred_check_branch
      %18 = sbr.rel (0) target = $region17
    $region16: #{tpu_custom_call.1} parent=1 // pred_region
      _
    $region17: #{tpu_custom_call.1} parent=1 // pred_fallthru
      _
    // Predicated region
    $region18: #{tpu_custom_call.1} parent=1 // pred_check
      _
    $region19: #{tpu_custom_call.1} parent=1 // pred_check_branch
      %20 = sbr.rel (0) target = $region21
    $region20: #{tpu_custom_call.1} parent=1 // pred_region
      _
    $region21: #{tpu_custom_call.1} parent=1 // pred_fallthru
      _
    %v21 = vld [vmem:[%s0] sm:$0xff]
    %v22 = vld [vmem:[%s1] sm:$0xff]
    %v23 = vld [vmem:[%s1 + $0x8] sm:$0xff]
    %v24 = vld [vmem:[%s2] sm:$0x3]
    %v26 = vperm.slane %v24, 0
    %v27 = vperm.slane %v24, 1
    %vm30 = vcmask 64512
    %v32 = vsel %vm30, %v21, 0
    %34 = vmatpush.msra.mxu0 0.0
    %35 = vmatpush.msra.mxu0 0.0
    %36 = vmatpush.msra.mxu0 0.0
    %37 = vmatpush.msra.mxu0 0.0
    %38 = vmatpush.msra.mxu0 0.0
    %39 = vmatpush.msra.mxu0 0.0
    %40 = vmatpush.msra.mxu0 0.0
    %41 = vmatpush.msra.mxu0 0.0
    %42 = vmatpush.msra.mxu0 0.0
    %43 = vmatpush.msra.mxu0 0.0
    %44 = vmatpush.msra.mxu0 0.0
    %45 = vmatpush.msra.mxu0 0.0
    %46 = vmatpush.msra.mxu0 0.0
    %47 = vmatpush.msra.mxu0 0.0
    %48 = vmatpush.msra.mxu0 0.0
    %49 = vmatpush.msra.mxu0 %v22
    %50 = vmatmul.f32.gmra.mxu0 %v32
    %v51 = vpop.f32.mrf.mxu0
    %v52 = vadd.f32 %v26, %v51
    %53 = vdwg.mxu0
    %54 = vmatpush.msra.mxu0 0.0
    %55 = vmatpush.msra.mxu0 0.0
    %56 = vmatpush.msra.mxu0 0.0
    %57 = vmatpush.msra.mxu0 0.0
    %58 = vmatpush.msra.mxu0 0.0
    %59 = vmatpush.msra.mxu0 0.0
    %60 = vmatpush.msra.mxu0 0.0
    %61 = vmatpush.msra.mxu0 0.0
    %62 = vmatpush.msra.mxu0 0.0
    %63 = vmatpush.msra.mxu0 0.0
    %64 = vmatpush.msra.mxu0 0.0
    %65 = vmatpush.msra.mxu0 0.0
    %66 = vmatpush.msra.mxu0 0.0
    %67 = vmatpush.msra.mxu0 0.0
    %68 = vmatpush.msra.mxu0 0.0
    %69 = vmatpush.msra.mxu0 %v23
    %70 = vmatmul.f32.gmra.mxu0 %v32
    %v71 = vpop.f32.mrf.mxu0
    %v72 = vadd.f32 %v27, %v71
    %73 = vdwg.mxu0
    %v74 = vtanh.pop %v52
    %v75 = vtanh.pop %v72
    %v76 = vld [vmem:[%s3] sm:$0xff]
    %v77 = vld [vmem:[%s3 + $0x8] sm:$0xff]
    %v78 = vld [vmem:[%s3 + $0x10] sm:$0xff]
    %v79 = vld [vmem:[%s3 + $0x18] sm:$0xff]
    %v80 = vld [vmem:[%s3 + $0x20] sm:$0xff]
    %v81 = vld [vmem:[%s3 + $0x28] sm:$0xff]
    %v82 = vld [vmem:[%s3 + $0x30] sm:$0xff]
    %v83 = vld [vmem:[%s3 + $0x38] sm:$0xff]
    %v84 = vld [vmem:[%s3 + $0x40] sm:$0xff]
    %v85 = vld [vmem:[%s3 + $0x48] sm:$0xff]
    %v86 = vld [vmem:[%s3 + $0x50] sm:$0xff]
    %v87 = vld [vmem:[%s3 + $0x58] sm:$0xff]
    %v88 = vld [vmem:[%s3 + $0x60] sm:$0xff]
    %v89 = vld [vmem:[%s3 + $0x68] sm:$0xff]
    %v90 = vld [vmem:[%s3 + $0x70] sm:$0xff]
    %v91 = vld [vmem:[%s3 + $0x78] sm:$0xff]
    %v92 = vld [vmem:[%s3 + $0x80] sm:$0xff]
    %v93 = vld [vmem:[%s3 + $0x88] sm:$0xff]
    %v94 = vld [vmem:[%s3 + $0x90] sm:$0xff]
    %v95 = vld [vmem:[%s3 + $0x98] sm:$0xff]
    %v96 = vld [vmem:[%s3 + $0xa0] sm:$0xff]
    %v97 = vld [vmem:[%s3 + $0xa8] sm:$0xff]
    %v98 = vld [vmem:[%s3 + $0xb0] sm:$0xff]
    %v99 = vld [vmem:[%s3 + $0xb8] sm:$0xff]
    %v100 = vld [vmem:[%s3 + $0xc0] sm:$0xff]
    %v101 = vld [vmem:[%s3 + $0xc8] sm:$0xff]
    %v102 = vld [vmem:[%s3 + $0xd0] sm:$0xff]
    %v103 = vld [vmem:[%s3 + $0xd8] sm:$0xff]
    %v104 = vld [vmem:[%s3 + $0xe0] sm:$0xff]
    %v105 = vld [vmem:[%s3 + $0xe8] sm:$0xff]
    %v106 = vld [vmem:[%s3 + $0xf0] sm:$0xff]
    %v107 = vld [vmem:[%s3 + $0xf8] sm:$0xff]
    %v108 = vld [vmem:[%s4] sm:$0x1]
    %v110 = vperm.slane %v108, 0
    %112 = vmatpush.msra.mxu0 %v91
    %113 = vmatpush.msra.mxu0 %v90
    %114 = vmatpush.msra.mxu0 %v89
    %115 = vmatpush.msra.mxu0 %v88
    %116 = vmatpush.msra.mxu0 %v87
    %117 = vmatpush.msra.mxu0 %v86
    %118 = vmatpush.msra.mxu0 %v85
    %119 = vmatpush.msra.mxu0 %v84
    %120 = vmatpush.msra.mxu0 %v83
    %121 = vmatpush.msra.mxu0 %v82
    %122 = vmatpush.msra.mxu0 %v81
    %123 = vmatpush.msra.mxu0 %v80
    %124 = vmatpush.msra.mxu0 %v79
    %125 = vmatpush.msra.mxu0 %v78
    %126 = vmatpush.msra.mxu0 %v77
    %127 = vmatpush.msra.mxu0 %v76
    %128 = vmatmul.f32.gmra.mxu0 %v74
    %v129 = vpop.f32.mrf.mxu0
    %v130 = vadd.f32 %v110, %v129
    %131 = vdwg.mxu0
    %132 = vmatpush.msra.mxu0 %v107
    %133 = vmatpush.msra.mxu0 %v106
    %134 = vmatpush.msra.mxu0 %v105
    %135 = vmatpush.msra.mxu0 %v104
    %136 = vmatpush.msra.mxu0 %v103
    %137 = vmatpush.msra.mxu0 %v102
    %138 = vmatpush.msra.mxu0 %v101
    %139 = vmatpush.msra.mxu0 %v100
    %140 = vmatpush.msra.mxu0 %v99
    %141 = vmatpush.msra.mxu0 %v98
    %142 = vmatpush.msra.mxu0 %v97
    %143 = vmatpush.msra.mxu0 %v96
    %144 = vmatpush.msra.mxu0 %v95
    %145 = vmatpush.msra.mxu0 %v94
    %146 = vmatpush.msra.mxu0 %v93
    %147 = vmatpush.msra.mxu0 %v92
    %148 = vmatmul.f32.gmra.mxu0 %v75
    %v149 = vpop.f32.mrf.mxu0
    %v150 = vadd.f32 %v130, %v149
    %151 = vdwg.mxu0
    %vm152 = vcmask 261120
    %153 = vst.msk [vmem:[#allocation2] sm:$0xff] %vm152, %v150
    // Predicated region
    $region22: #{tpu_custom_call.1} parent=1 // pred_check
      _
    $region23: #{tpu_custom_call.1} parent=1 // pred_check_branch
      %155 = sbr.rel (0) target = $region25
    $region24: #{tpu_custom_call.1} parent=1 // pred_region
      %157 = vsyncadd [#allocation3], 0
      %s159 = sshll.u32 [#allocation2], 4
      %s160 = int_to_ptr.vmem [resolvable:$true] %s159
      %s161 = sshll.u32 %s5, 4
      %s162 = int_to_ptr.hbm [resolvable:$true] %s161
      %164 = dma.vmem_to_hbm [thread:$0]  %s160, 128, %s162, [#allocation3]
    $region25: #{tpu_custom_call.1} parent=1 // pred_fallthru
      _
    // Predicated region
    $region26: #{tpu_custom_call.1} parent=1 // pred_check
      _
    $region27: #{tpu_custom_call.1} parent=1 // pred_check_branch
      %166 = sbr.rel (0) target = $region29
    $region28: #{tpu_custom_call.1} parent=1 // pred_region
      %168 = dma.done [#allocation3], 128
    $region29: #{tpu_custom_call.1} parent=1 // pred_fallthru
      _
    %169 = vsyncpa [#allocation3], 1

</llo_original>
